<compile_context>
chip_gen: v5e
topology: v5e:2x2
jax: 0.10.0
libtpu: 0.0.40
codegen_flags: <defaults>
</compile_context>

<pallas_src>
from functools import partial

import jax
import jax.numpy as jnp
from jax.experimental import pallas as pl
from jax.experimental.pallas import tpu as pltpu


def mask_embed_kernel(x_ref, w_ref, b_ref, o_ref, *, pack):
    # x_ref: (TR, PACK)        packed mask values (PACK consecutive positions per row)
    # w_ref: (PACK, PACK*E)    block-diagonal weight: row q holds w[:] in lane block q
    # b_ref: (1, PACK*E)       bias tiled PACK times along lanes
    # o_ref: (TR, PACK*E)      lane-dense output tile (PACK*E == 128 when E divides 128)
    x = x_ref[...]                                   # (TR, PACK) f32
    w = w_ref[...]                                   # (PACK, LANE) f32
    # PACK full-width VPU multiply-adds; every intermediate is a full 128-lane vreg, so the
    # final store is a single unmasked full-width vst per vreg.
    acc = x[:, 0:1] * w[0:1, :] + b_ref[...]         # (TR, LANE)
    for q in range(1, pack):                         # static unroll (pack is small: <= 128)
        acc = acc + x[:, q:q + 1] * w[q:q + 1, :]
    o_ref[...] = acc.astype(o_ref.dtype)


def mask_embed(x_ncl, weight, bias, *, out_dtype=jnp.float32):
    """x_ncl: (B, 1, L); weight: (E, 1, 1); bias: (E,)  ->  (B, L, E)."""
    B, C, L = x_ncl.shape
    assert C == 1, "MaskEmbed expects a single input channel"
    E = int(weight.shape[0])
    N = B * L

    # Pack consecutive positions so the stored last dim is a multiple of 128 lanes.
    if E < 128 and 128 % E == 0 and N % (128 // E) == 0:
        pack = 128 // E
    else:
        pack = 1                          # E >= 128 (lane-dense if E % 128 == 0) or ragged N
    R = N // pack
    lane = pack * E

    x_packed = x_ncl.reshape(R, pack).astype(jnp.float32)     # free row-major reshape
    w_row = weight.reshape(1, E).astype(jnp.float32)
    b_row = bias.reshape(1, E).astype(jnp.float32)
    if pack == 1:
        w_blk = w_row                                          # (1, E)
        b_blk = b_row                                          # (1, E)
    else:
        # Block-diagonal expansion: w_blk[q, p*E + e] = w[e] if q == p else 0.
        w_blk = jnp.kron(jnp.eye(pack, dtype=jnp.float32), w_row)   # (pack, pack*E)
        b_blk = jnp.tile(b_row, (1, pack))                          # (1, pack*E)

    out_itemsize = jnp.dtype(out_dtype).itemsize
    row_bytes = lane * out_itemsize

    # Tile-row selection: ~4 MiB output tiles (amortizes ~0.35 us/step overhead to ~10%),
    # multiple of 8 sublanes, and >= 2 grid steps when possible (megacore sharding).
    # Double-buffered worst case ~8 MiB VMEM -> safely under default scoped limits.
    if R <= 8:
        tr = R
    else:
        tr = min(R, max(8, (4 * 1024 * 1024) // row_bytes))
        tr = max(8, (tr // 8) * 8)
        if tr >= R:
            tr = max(8, ((R // 2) // 8) * 8)
    grid = (pl.cdiv(R, tr),)

    cost = pl.CostEstimate(
        flops=2 * N * E,
        transcendentals=0,
        bytes_accessed=4 * N + 4 * (pack * lane + lane) + N * E * out_itemsize,
    )

    out_packed = pl.pallas_call(
        partial(mask_embed_kernel, pack=pack),
        out_shape=jax.ShapeDtypeStruct((R, lane), out_dtype),
        grid=grid,
        in_specs=[
            pl.BlockSpec((tr, pack), lambda i: (i, 0)),     # packed mask rows
            pl.BlockSpec((pack, lane), lambda i: (0, 0)),   # block-diag weight (broadcast)
            pl.BlockSpec((1, lane), lambda i: (0, 0)),      # tiled bias       (broadcast)
        ],
        out_specs=pl.BlockSpec((tr, lane), lambda i: (i, 0)),
        compiler_params=pltpu.CompilerParams(dimension_semantics=("parallel",)),
        cost_estimate=cost,
    )(x_packed, w_blk, b_blk)

    return out_packed.reshape(B, L, E)   # free: packed layout is exactly (B, L, E) row-major


if __name__ == "__main__":
    # Small shapes consistent with the module: batch B = 2, rec_len L = 16, embed_dim E = 64.
    B, L, E = 2, 16, 64
    key = jax.random.PRNGKey(0)
    kx, kw, kb = jax.random.split(key, 3)

    x = jax.random.normal(kx, (B, 1, L), dtype=jnp.float32)               # NCL like PyTorch
    weight = jax.random.normal(kw, (E, 1, 1), dtype=jnp.float32) * 0.02   # Conv1d weight (E,1,1)
    bias = jax.random.normal(kb, (E,), dtype=jnp.float32) * 0.02          # Conv1d bias (E,)

    out = mask_embed(x, weight, bias)
    out = jax.block_until_ready(out)

    # Pure-JAX reference: conv1d(k=1, cin=1) + transpose(1, 2), norm = Identity
    ref = x[:, 0, :, None] * weight.reshape(1, 1, E) + bias.reshape(1, 1, E)  # (B, L, E)
    assert out.shape == (B, L, E)
    assert jnp.allclose(out, ref, atol=1e-5, rtol=1e-5)

    print("KERNEL_OK")
</pallas_src>

<mosaic_0001>
module attributes {stable_mosaic.version = 11 : i64} {
  func.func @mask_embed_kernel(%arg0: i32, %arg1: memref<8x2xf32, #tpu.memory_space<vmem>>, %arg2: memref<2x128xf32, #tpu.memory_space<vmem>>, %arg3: memref<1x128xf32, #tpu.memory_space<vmem>>, %arg4: memref<8x128xf32, #tpu.memory_space<vmem>>) attributes {dimension_semantics = [#tpu.dimension_semantics<parallel>], iteration_bounds = array<i64: 2>, scalar_prefetch = 0 : i64, scratch_operands = 0 : i64, tpu.core_type = #tpu.core_type<tc>, window_params = [{transform_indices = @transform_0, window_bounds = array<i64: 8, 2>}, {pipeline_mode = #tpu.pipeline_mode<synchronous>, transform_indices = @transform_1, window_bounds = array<i64: 2, 128>}, {pipeline_mode = #tpu.pipeline_mode<synchronous>, transform_indices = @transform_2, window_bounds = array<i64: 1, 128>}, {transform_indices = @transform_3, window_bounds = array<i64: 8, 128>}]} {
    %c0 = arith.constant 0 : index
    %c0_0 = arith.constant 0 : index
    %0 = vector.load %arg1[%c0, %c0_0] : memref<8x2xf32, #tpu.memory_space<vmem>>, vector<8x2xf32>
    %c0_1 = arith.constant 0 : index
    %c0_2 = arith.constant 0 : index
    %1 = vector.load %arg2[%c0_1, %c0_2] : memref<2x128xf32, #tpu.memory_space<vmem>>, vector<2x128xf32>
    %2 = vector.extract_strided_slice %0 {offsets = [0, 0], sizes = [8, 1], strides = [1, 1]} : vector<8x2xf32> to vector<8x1xf32>
    %3 = vector.extract_strided_slice %1 {offsets = [0, 0], sizes = [1, 128], strides = [1, 1]} : vector<2x128xf32> to vector<1x128xf32>
    %4 = vector.broadcast %2 : vector<8x1xf32> to vector<8x128xf32>
    %5 = vector.broadcast %3 : vector<1x128xf32> to vector<8x128xf32>
    %6 = arith.mulf %4, %5 : vector<8x128xf32>
    %c0_3 = arith.constant 0 : index
    %c0_4 = arith.constant 0 : index
    %7 = vector.load %arg3[%c0_3, %c0_4] : memref<1x128xf32, #tpu.memory_space<vmem>>, vector<1x128xf32>
    %8 = vector.broadcast %7 : vector<1x128xf32> to vector<8x128xf32>
    %9 = arith.addf %6, %8 : vector<8x128xf32>
    %10 = vector.extract_strided_slice %0 {offsets = [0, 1], sizes = [8, 1], strides = [1, 1]} : vector<8x2xf32> to vector<8x1xf32>
    %11 = vector.extract_strided_slice %1 {offsets = [1, 0], sizes = [1, 128], strides = [1, 1]} : vector<2x128xf32> to vector<1x128xf32>
    %12 = vector.broadcast %10 : vector<8x1xf32> to vector<8x128xf32>
    %13 = vector.broadcast %11 : vector<1x128xf32> to vector<8x128xf32>
    %14 = arith.mulf %12, %13 : vector<8x128xf32>
    %15 = arith.addf %9, %14 : vector<8x128xf32>
    %c0_5 = arith.constant 0 : index
    %c0_6 = arith.constant 0 : index
    %16 = vector.load %arg4[%c0_5, %c0_6] : memref<8x128xf32, #tpu.memory_space<vmem>>, vector<8x128xf32>
    tpu.vector_store %arg4[%c0_5, %c0_6], %15 {strides = array<i32>} : memref<8x128xf32, #tpu.memory_space<vmem>>, vector<8x128xf32>,
    return
  }
  func.func @transform_0(%arg0: i32) -> (i32, i32) {
    %c0_i32 = arith.constant 0 : i32
    %c0_i32_0 = arith.constant 0 : i32
    return %arg0, %c0_i32 : i32, i32
  }
  func.func @transform_1(%arg0: i32) -> (i32, i32) {
    %c0_i32 = arith.constant 0 : i32
    %c0_i32_0 = arith.constant 0 : i32
    %c0_i32_1 = arith.constant 0 : i32
    return %c0_i32, %c0_i32_0 : i32, i32
  }
  func.func @transform_2(%arg0: i32) -> (i32, i32) {
    %c0_i32 = arith.constant 0 : i32
    %c0_i32_0 = arith.constant 0 : i32
    %c0_i32_1 = arith.constant 0 : i32
    return %c0_i32, %c0_i32_0 : i32, i32
  }
  func.func @transform_3(%arg0: i32) -> (i32, i32) {
    %c0_i32 = arith.constant 0 : i32
    %c0_i32_0 = arith.constant 0 : i32
    return %arg0, %c0_i32 : i32, i32
  }
}

</mosaic_0001>

<llo_original>
// kernel: tpu_custom_call.1
$region0: #{tpu_custom_call.1}
  #allocation0 [shape = 'u32[]', space=smem, size = 0x4, offset = 0x4, fixed_abs, tag = 'smem constant byte address 0x4 - core index']
  #allocation1 [shape = 'u32[72,128]{1,0:T(1,128)}', space=vmem, size = 0x9000, scoped, tag = 'internal scratch']
  %s0 = inlined_call_operand.vmem [shape: f32[16,2], index: 0, kind: input, shape index: {}]
  %s1 = inlined_call_operand.vmem [shape: f32[2,128], index: 1, kind: input, shape index: {}]
  %s2 = inlined_call_operand.vmem [shape: f32[1,128], index: 2, kind: input, shape index: {}]
  %s3 = inlined_call_operand.hbm [shape: f32[16,128], index: 3, kind: output, shape index: {}]
  %s4 = sld [smem:[#allocation0]]
  $region45: #{tpu_custom_call.1} parent=0
    _
  %s6 = ssub.s32 1, %s4
  %s7 = scalar_select 0, %s6, %s4
  $region1: #{tpu_custom_call.1} parent=0
    #allocation2 [shape = 'u8[8192]{0}', space=vmem, size = 0x2000, scoped, tag = 'output window, operand 0']
    #allocation3 [shape = 's32[2]{0}', space=sflag, size = 0x8, scoped, tag = 'scoped memory for tpu_custom_call.1']
    %8 = vsyncpa [#allocation3], 0
    %s9 = scalar_lea.sflag [#allocation3], 1
    %10 = vsyncpa %s9, 0
    loop: start=0, step=1, limit=4
    $region2: #{tpu_custom_call.1} parent=1 // loop_pre_header
      _
    $region3: #{tpu_custom_call.1} parent=1 // loop_header
      %s12 = sphi 0, %s16
      %p13 = scmp.ge.s32.totalorder %s12, 4
      %s22 = sphi 0, %s24
      %s25 = sphi 0, %s22
      %s26 = sphi 0, %s25
      %s42 = sphi 0, %s26
      %s46 = sphi 0, %s46
      %s48 = sphi 0, %s46
      %s49 = sphi 0, %s48
      %s63 = sphi 0, %s49
      %s67 = sphi 0, %s67
      %s69 = sphi 0, %s67
      %s70 = sphi 0, %s69
      %s84 = sphi 0, %s70
      %s90 = sphi 0, %s92
      %s93 = sphi 0, %s90
      %s94 = sphi 0, %s93
      %s110 = sphi 0, %s94
    $region4: #{tpu_custom_call.1} parent=1 // loop_header_branch
      %15 = sbr.rel (%p13) target = $region8
    $region5: #{tpu_custom_call.1} parent=1 // loop_body
      %s17 = ssub.s32 %s12, 1
      %s18 = ssub.s32 %s12, 2
      %s19 = sadd.s32 %s12, 1
      %s20 = ssub.s32 %s12, %s19
      %p21 = scmp.eq.s32.totalorder %s20, 0
      %s23 = sadd.s32 %s22, 1
      %s24 = scalar_select %p21, %s22, %s23
      %p27 = pneg %p21
      %p28 = scmp.eq.s32.totalorder %s12, 1
      %p29 = por %p27, %p28
      %p30 = scmp.ne.s32.totalorder %s22, %s25
      %p31 = scmp.eq.s32.totalorder %s12, 0
      %p32 = por %p30, %p31
      %p33 = scmp.ne.s32.totalorder %s22, %s25
      %p34 = scmp.eq.s32.totalorder %s17, 1
      %p35 = por %p33, %p34
      %p36 = scmp.ne.s32.totalorder %s25, %s26
      %p37 = scmp.eq.s32.totalorder %s17, 0
      %p38 = por %p36, %p37
      %p39 = scmp.ne.s32.totalorder %s25, %s26
      %p40 = scmp.eq.s32.totalorder %s18, 1
      %p41 = por %p39, %p40
      %p43 = scmp.ne.s32.totalorder %s26, %s42
      %p44 = scmp.eq.s32.totalorder %s18, 0
      %p45 = por %p43, %p44
      %s47 = sadd.s32 %s46, 1
      %p50 = scmp.eq.s32.totalorder %s12, 1
      %p51 = scmp.ne.s32.totalorder %s46, %s48
      %p52 = scmp.eq.s32.totalorder %s12, 0
      %p53 = por %p51, %p52
      %p54 = scmp.ne.s32.totalorder %s46, %s48
      %p55 = scmp.eq.s32.totalorder %s17, 1
      %p56 = por %p54, %p55
      %p57 = scmp.ne.s32.totalorder %s48, %s49
      %p58 = scmp.eq.s32.totalorder %s17, 0
      %p59 = por %p57, %p58
      %p60 = scmp.ne.s32.totalorder %s48, %s49
      %p61 = scmp.eq.s32.totalorder %s18, 1
      %p62 = por %p60, %p61
      %p64 = scmp.ne.s32.totalorder %s49, %s63
      %p65 = scmp.eq.s32.totalorder %s18, 0
      %p66 = por %p64, %p65
      %s68 = sadd.s32 %s67, 1
      %p71 = scmp.eq.s32.totalorder %s12, 1
      %p72 = scmp.ne.s32.totalorder %s67, %s69
      %p73 = scmp.eq.s32.totalorder %s12, 0
      %p74 = por %p72, %p73
      %p75 = scmp.ne.s32.totalorder %s67, %s69
      %p76 = scmp.eq.s32.totalorder %s17, 1
      %p77 = por %p75, %p76
      %p78 = scmp.ne.s32.totalorder %s69, %s70
      %p79 = scmp.eq.s32.totalorder %s17, 0
      %p80 = por %p78, %p79
      %p81 = scmp.ne.s32.totalorder %s69, %s70
      %p82 = scmp.eq.s32.totalorder %s18, 1
      %p83 = por %p81, %p82
      %p85 = scmp.ne.s32.totalorder %s70, %s84
      %p86 = scmp.eq.s32.totalorder %s18, 0
      %p87 = por %p85, %p86
      %s88 = ssub.s32 %s12, %s19
      %p89 = scmp.eq.s32.totalorder %s88, 0
      %s91 = sadd.s32 %s90, 1
      %s92 = scalar_select %p89, %s90, %s91
      %p95 = pneg %p89
      %p96 = scmp.eq.s32.totalorder %s12, 1
      %p97 = por %p95, %p96
      %p98 = scmp.ne.s32.totalorder %s90, %s93
      %p99 = scmp.eq.s32.totalorder %s12, 0
      %p100 = por %p98, %p99
      %p101 = scmp.ne.s32.totalorder %s90, %s93
      %p102 = scmp.eq.s32.totalorder %s17, 1
      %p103 = por %p101, %p102
      %p104 = scmp.ne.s32.totalorder %s93, %s94
      %p105 = scmp.eq.s32.totalorder %s17, 0
      %p106 = por %p104, %p105
      %p107 = scmp.ne.s32.totalorder %s93, %s94
      %p108 = scmp.eq.s32.totalorder %s18, 1
      %p109 = por %p107, %p108
      %p111 = scmp.ne.s32.totalorder %s94, %s110
      %p112 = scmp.eq.s32.totalorder %s18, 0
      %p113 = por %p111, %p112
      %p114 = scmp.le.s32.totalorder 1, %s12
      %p115 = scmp.lt.s32.totalorder %s12, 3
      %p116 = pnand %p114, %p115
      %p117 = pneg %p116
      // Predicated region
      $region9: #{tpu_custom_call.1} parent=5 // pred_check
        _
      $region10: #{tpu_custom_call.1} parent=5 // pred_check_branch
        %119 = sbr.rel (%p116) target = $region12
      $region11: #{tpu_custom_call.1} parent=5 // pred_region
        %s120 = ssub.s32 %s12, 1
        // Predicated region
        $region13: #{tpu_custom_call.1} parent=11 // pred_check
          %p121 = pneg %p59
        $region14: #{tpu_custom_call.1} parent=11 // pred_check_branch
          %123 = sbr.rel (%p121) target = $region16
        $region15: #{tpu_custom_call.1} parent=11 // pred_region
          _
        $region16: #{tpu_custom_call.1} parent=11 // pred_fallthru
          _
        // Predicated region
        $region17: #{tpu_custom_call.1} parent=11 // pred_check
          %p124 = pneg %p80
        $region18: #{tpu_custom_call.1} parent=11 // pred_check_branch
          %126 = sbr.rel (%p124) target = $region20
        $region19: #{tpu_custom_call.1} parent=11 // pred_region
          _
        $region20: #{tpu_custom_call.1} parent=11 // pred_fallthru
          _
      $region12: #{tpu_custom_call.1} parent=5 // pred_fallthru
        _
      %p127 = scmp.lt.s32.totalorder %s12, 2
      // Predicated region
      $region21: #{tpu_custom_call.1} parent=5 // pred_check
        %p128 = pneg %p127
      $region22: #{tpu_custom_call.1} parent=5 // pred_check_branch
        %130 = sbr.rel (%p128) target = $region24
      $region23: #{tpu_custom_call.1} parent=5 // pred_region
        // Predicated region
        $region25: #{tpu_custom_call.1} parent=23 // pred_check
          %p131 = pneg %p32
        $region26: #{tpu_custom_call.1} parent=23 // pred_check_branch
          %133 = sbr.rel (%p131) target = $region28
        $region27: #{tpu_custom_call.1} parent=23 // pred_region
          %p134 = scmp.lt.s32.totalorder %s12, 1
          %s135 = scalar_select %p134, %s12, 1
          %s136 = smul.addr %s135, 8
          %s137 = scalar_lea.vmem %s0, %s136
        $region28: #{tpu_custom_call.1} parent=23 // pred_fallthru
          _
      $region24: #{tpu_custom_call.1} parent=5 // pred_fallthru
        _
      %p138 = scmp.le.s32.totalorder 1, %s12
      %p139 = scmp.lt.s32.totalorder %s12, 3
      %p140 = pnand %p138, %p139
      %p141 = pneg %p140
      // Predicated region
      $region29: #{tpu_custom_call.1} parent=5 // pred_check
        _
      $region30: #{tpu_custom_call.1} parent=5 // pred_check_branch
        %143 = sbr.rel (%p140) target = $region32
      $region31: #{tpu_custom_call.1} parent=5 // pred_region
        %s144 = ssub.s32 %s12, 1
        %p145 = scmp.lt.s32.totalorder %s17, 1
        %s146 = scalar_select %p145, %s17, 1
        %s147 = smul.addr %s146, 8
        %s148 = scalar_lea.vmem %s0, %s147
        %p149 = pneg %p38
        %p150 = pneg %p35
        %p151 = pneg %p59
        %p152 = pneg %p56
        %p153 = pneg %p80
        %p154 = pneg %p77
        %p155 = pneg %p106
        %p156 = pneg %p103
        %s157 = sand.u32 %s93, 1
        %s158 = scalar_lea.sflag [#allocation3], %s157
        %s159 = sand.u32 %s93, 1
        %s160 = smul.addr %s159, 8
        %s161 = scalar_lea.vmem [#allocation2], %s160
        %p162 = scmp.lt.s32.totalorder %s17, 1
        %s163 = scalar_select %p162, %s17, 1
        %s164 = smul.addr %s163, 8
        %s165 = scalar_lea.vmem %s0, %s164
        %v166 = vld [vmem:[%s165] sm:$0xff]
        %v167 = vld [vmem:[%s1] sm:$0x3]
        %169 = vset.pattern.permute.xlu0 0
        %170 = vperm.xlu0 %169, %v166
        %v171 = vpop.permute.xlu0 %170
        %v173 = vperm.slane %v167, 0
        %v174 = vmul.f32 %v171, %v173
        %v175 = vld [vmem:[%s2] sm:$0x1]
        %v177 = vperm.slane %v175, 0
        %v179 = vadd.f32 %v174, %v177
        %180 = vset.pattern.permute.xlu0 1
        %181 = vperm.xlu0 %180, %v166
        %v182 = vpop.permute.xlu0 %181
        %v184 = vperm.slane %v167, 1
        %v185 = vmul.f32 %v182, %v184
        %v186 = vadd.f32 %v179, %v185
        %187 = vst [vmem:[%s161] sm:$0xff] %v186
        %s188 = sand.u32 %s93, 1
        %s189 = scalar_lea.sflag [#allocation3], %s188
        %s190 = sand.u32 %s93, 1
        %s191 = smul.addr %s190, 8
        %s192 = scalar_lea.vmem [#allocation2], %s191
        // Predicated region
        $region33: #{tpu_custom_call.1} parent=31 // pred_check
          %p193 = pneg %p103
        $region34: #{tpu_custom_call.1} parent=31 // pred_check_branch
          %195 = sbr.rel (%p193) target = $region36
        $region35: #{tpu_custom_call.1} parent=31 // pred_region
          %197 = vsyncadd %s189, 0
          %s198 = smul.addr %s17, 8
          %s199 = scalar_lea.hbm %s3, %s198
          %s201 = sshll.u32 %s192, 4
          %s202 = int_to_ptr.vmem [resolvable:$true] %s201
          %s203 = sshll.u32 %s199, 4
          %s204 = int_to_ptr.hbm [resolvable:$true] %s203
          %206 = dma.vmem_to_hbm [thread:$0]  %s202, 128, %s204, %s189
        $region36: #{tpu_custom_call.1} parent=31 // pred_fallthru
          _
      $region32: #{tpu_custom_call.1} parent=5 // pred_fallthru
        _
      %p207 = scmp.le.s32.totalorder 2, %s12
      // Predicated region
      $region37: #{tpu_custom_call.1} parent=5 // pred_check
        %p208 = pneg %p207
      $region38: #{tpu_custom_call.1} parent=5 // pred_check_branch
        %210 = sbr.rel (%p208) target = $region40
      $region39: #{tpu_custom_call.1} parent=5 // pred_region
        %s211 = ssub.s32 %s12, 2
        // Predicated region
        $region41: #{tpu_custom_call.1} parent=39 // pred_check
          %p212 = pneg %p109
        $region42: #{tpu_custom_call.1} parent=39 // pred_check_branch
          %214 = sbr.rel (%p212) target = $region44
        $region43: #{tpu_custom_call.1} parent=39 // pred_region
          %s215 = sand.u32 %s94, 1
          %s216 = scalar_lea.sflag [#allocation3], %s215
          %s217 = sand.u32 %s94, 1
          %s218 = smul.addr %s217, 8
          %s219 = scalar_lea.vmem [#allocation2], %s218
          %221 = dma.done %s216, 128
        $region44: #{tpu_custom_call.1} parent=39 // pred_fallthru
          _
      $region40: #{tpu_custom_call.1} parent=5 // pred_fallthru
        _
    $region6: #{tpu_custom_call.1} parent=1 // loop_footer
      %s16 = sadd.s32 1, %s12
    $region7: #{tpu_custom_call.1} parent=1 // loop_footer_branch
      %11 = sbr.rel target = $region3
    $region8: #{tpu_custom_call.1} parent=1 // loop_exit
      _
    %222 = vsyncpa [#allocation3], 1
    %s223 = scalar_lea.sflag [#allocation3], 1
    %224 = vsyncpa %s223, 1

</llo_original>
